<compile_context>
chip_gen: v7x
topology: tpu7x:2x2x1
jax: 0.10.0
libtpu: 0.0.40
codegen_flags: <defaults>
</compile_context>

<pallas_src>
import functools

import jax
import jax.numpy as jnp
from jax.experimental import pallas as pl
from jax.experimental.pallas import tpu as pltpu


def _round_up(n, m):
    return ((n + m - 1) // m) * m


def _ce_center_kernel(y_ref, x_ref, labels_ref, centers_ref, out_ref,
                      *, batch, block_rows, tiles_per_core):
    """One batch tile: accumulate sum(CE_row) and sum(||x - c_label||^2) per core."""
    core = pl.program_id(0)
    step = pl.program_id(1)

    @pl.when(step == 0)
    def _init():
        out_ref[0, 0] = jnp.float32(0.0)
        out_ref[0, 1] = jnp.float32(0.0)

    # Global row offset of this tile.  Uses the *unclamped* tile index so that rows past
    # `batch` (partial tail tile, or the duplicate tile a clamped index map fetches when
    # the tile count is odd) are fully masked out.
    tile_idx = core * tiles_per_core + step
    row0 = tile_idx * block_rows

    y = y_ref[...]               # [tb, C] f32 logits (tail rows may hold garbage)
    x = x_ref[...]               # [tb, D] f32 features
    cen = centers_ref[...]       # [C, D] f32 centers (VMEM resident, single buffer)
    labels = labels_ref[...]     # [tb, 1] int32

    rows, n_classes = y.shape
    row_ids = row0 + jax.lax.broadcasted_iota(jnp.int32, (rows, 1), 0)
    valid = row_ids < batch                                        # [tb, 1]

    classes = jax.lax.broadcasted_iota(jnp.int32, (rows, n_classes), 1)
    hit = labels == classes                                        # [tb, C] bool

    # ---- cross entropy: stable log-sum-exp minus the true-class logit ----
    m = jnp.max(y, axis=1, keepdims=True)                                  # [tb, 1]
    lse = jnp.log(jnp.sum(jnp.exp(y - m), axis=1, keepdims=True)) + m      # [tb, 1]
    logit_true = jnp.sum(jnp.where(hit, y, 0.0), axis=1, keepdims=True)    # [tb, 1]
    ce_rows = jnp.where(valid, lse - logit_true, 0.0)                      # [tb, 1]

    # ---- center loss via gathered centers: one_hot @ centers on the MXU ----
    onehot = hit.astype(jnp.float32)                                       # [tb, C]
    gathered = jnp.dot(onehot, cen, preferred_element_type=jnp.float32)    # [tb, D]
    diff = x - gathered
    sq_rows = jnp.where(valid, jnp.sum(diff * diff, axis=1, keepdims=True), 0.0)

    out_ref[0, 0] += jnp.sum(ce_rows)
    out_ref[0, 1] += jnp.sum(sq_rows)


def cross_entropy_center_loss(feature, y, label, centers, lam, *, block_rows=None):
    """feature: [B, D] f32, y: [B, C] f32, label: [B] int, centers: [C, D] f32."""
    B, D = feature.shape
    B2, C = y.shape
    assert B2 == B and centers.shape == (C, D)

    feature = feature.astype(jnp.float32)
    y = y.astype(jnp.float32)
    centers = centers.astype(jnp.float32)
    labels2d = label.astype(jnp.int32).reshape(B, 1)   # tiny; vector compare in-kernel

    # ---- VMEM-budget-derived batch tile (no HBM-side padding copies) ----
    try:
        vmem_cap = int(pltpu.get_tpu_info().vmem_capacity_bytes)
    except Exception:
        vmem_cap = 0
    if vmem_cap <= 0:
        vmem_cap = 64 * 1024 * 1024        # v7x per-TensorCore VMEM (smallest current gen)

    c_lanes = _round_up(C, 128)            # physical lane footprint inside VMEM
    d_lanes = _round_up(D, 128)
    centers_bytes = _round_up(C, 8) * d_lanes * 4               # single-buffered centers
    per_row_bytes = 4 * (3 * c_lanes + 3 * d_lanes + 8 * 128)   # dbl-buffered y/x/labels + temps

    vmem_budget = (vmem_cap * 6) // 10
    tb_cap = max(8, min(1024, ((vmem_budget - centers_bytes) // per_row_bytes // 8) * 8))

    if block_rows is not None:
        tb = int(block_rows)               # caller override (must be mult. of 8 or == B)
    elif B <= tb_cap:
        tb = B                             # one full tile, zero padded rows
    else:
        n_min = pl.cdiv(B, tb_cap)         # balance tiles to minimize tail waste
        tb = _round_up(pl.cdiv(B, n_min), 8)

    num_tiles = pl.cdiv(B, tb)
    num_cores = 2 if num_tiles > 1 else 1  # v7x has 2 TCs; a cheap loop elsewhere
    tiles_per_core = pl.cdiv(num_tiles, num_cores)
    last_tile = num_tiles - 1

    def row_map(c, s):
        # Clamp so the DMA stays in-bounds; the duplicate tile is fully masked in-kernel.
        return (jnp.minimum(c * tiles_per_core + s, last_tile), 0)

    kernel = functools.partial(
        _ce_center_kernel, batch=B, block_rows=tb, tiles_per_core=tiles_per_core)

    cost = pl.CostEstimate(
        flops=2 * B * C * D + 8 * B * C + 4 * B * D,
        transcendentals=B * C + B,
        # centers fetched once (constant index map), not once per tile.
        bytes_accessed=4 * (B * C + B * D + C * D + B) + 8 * num_cores,
    )

    needed = centers_bytes + tb * per_row_bytes + (4 << 20)
    vmem_limit = int(min((vmem_cap * 3) // 4, max(needed, 32 * 1024 * 1024)))

    sums = pl.pallas_call(
        kernel,
        out_shape=jax.ShapeDtypeStruct((num_cores, 2), jnp.float32),
        grid_spec=pltpu.PrefetchScalarGridSpec(
            num_scalar_prefetch=0,
            grid=(num_cores, tiles_per_core),
            in_specs=[
                pl.BlockSpec((tb, C), row_map),                 # logits tile
                pl.BlockSpec((tb, D), row_map),                 # feature tile
                pl.BlockSpec((tb, 1), row_map),                 # labels tile
                pl.BlockSpec((C, D), lambda c, s: (0, 0),       # centers: resident,
                             pipeline_mode=pl.Buffered(1)),     #   single-buffered
            ],
            out_specs=pl.BlockSpec((1, 2), lambda c, s: (c, 0),
                                   memory_space=pltpu.MemorySpace.SMEM),
        ),
        compiler_params=pltpu.CompilerParams(
            # core-split axis is parallel (v7x megacore); batch-tile axis carries the
            # per-core accumulator -> reduction axis.
            dimension_semantics=("parallel", "arbitrary"),
            vmem_limit_bytes=vmem_limit,
        ),
        cost_estimate=cost,
    )(y, feature, labels2d, centers)

    ce_sum = jnp.sum(sums[:, 0])
    center_sum = jnp.sum(sums[:, 1])
    # mean over the true batch; lambda applied outside the kernel (no recompiles).
    return (ce_sum + lam * center_sum) / B


def _reference(feature, y, label, centers, lam):
    logp = jax.nn.log_softmax(y, axis=-1)
    ce = -jnp.mean(jnp.take_along_axis(logp, label[:, None].astype(jnp.int32), axis=1))
    diff = feature - centers[label]
    center = jnp.mean(jnp.sum(diff * diff, axis=1))
    return ce + lam * center


if __name__ == "__main__":
    # params: output_channels (num classes), feature_dims, lambDA
    batch = 8
    num_classes = 10
    feat_dim = 32
    lambDA = 0.01

    key = jax.random.PRNGKey(0)
    k1, k2, k3, k4 = jax.random.split(key, 4)

    feature = jax.random.normal(k1, (batch, feat_dim), dtype=jnp.float32)
    y = jax.random.normal(k2, (batch, num_classes), dtype=jnp.float32)          # logits
    label = jax.random.randint(k3, (batch,), 0, num_classes, dtype=jnp.int32)
    centers = jax.random.normal(k4, (num_classes, feat_dim), dtype=jnp.float32)  # nn.Parameter(randn)

    loss = cross_entropy_center_loss(feature, y, label, centers, lambDA)
    jax.block_until_ready(loss)
    ref = _reference(feature, y, label, centers, lambDA)
    assert jnp.allclose(loss, ref, rtol=1e-5, atol=1e-5), (loss, ref)

    # Also exercise the multi-tile / dual-core-split / partial-tail-mask path at a
    # small size by forcing an 8-row tile over a 20-row batch.
    batch2 = 20
    f2 = jax.random.normal(k1, (batch2, feat_dim), dtype=jnp.float32)
    y2 = jax.random.normal(k2, (batch2, num_classes), dtype=jnp.float32)
    l2 = jax.random.randint(k3, (batch2,), 0, num_classes, dtype=jnp.int32)
    loss2 = cross_entropy_center_loss(f2, y2, l2, centers, lambDA, block_rows=8)
    jax.block_until_ready(loss2)
    ref2 = _reference(f2, y2, l2, centers, lambDA)
    assert jnp.allclose(loss2, ref2, rtol=1e-5, atol=1e-5), (loss2, ref2)

    print("KERNEL_OK")
</pallas_src>

<mosaic_0001>
module attributes {stable_mosaic.version = 11 : i64} {
  func.func @_ce_center_kernel(%arg0: i32, %arg1: i32, %arg2: memref<8x10xf32, #tpu.memory_space<vmem>>, %arg3: memref<8x32xf32, #tpu.memory_space<vmem>>, %arg4: memref<8x1xi32, #tpu.memory_space<vmem>>, %arg5: memref<10x32xf32, #tpu.memory_space<vmem>>, %arg6: memref<1x2xf32, #tpu.memory_space<smem>>) attributes {dimension_semantics = [#tpu.dimension_semantics<parallel>, #tpu.dimension_semantics<arbitrary>], iteration_bounds = array<i64: 1, 1>, scalar_prefetch = 0 : i64, scratch_operands = 0 : i64, tpu.core_type = #tpu.core_type<tc>, window_params = [{transform_indices = @transform_0, window_bounds = array<i64: 8, 10>}, {transform_indices = @transform_1, window_bounds = array<i64: 8, 32>}, {transform_indices = @transform_2, window_bounds = array<i64: 8, 1>}, {pipeline_mode = #tpu.pipeline_mode<synchronous>, transform_indices = @transform_3, window_bounds = array<i64: 10, 32>}, {transform_indices = @transform_4, window_bounds = array<i64: 1, 2>}]} {
    %c0_i32 = arith.constant 0 : i32
    %0 = arith.cmpi eq, %arg1, %c0_i32 : i32
    %1 = arith.extui %0 : i1 to i32
    %c0_i32_0 = arith.constant 0 : i32
    %2 = arith.cmpi ne, %1, %c0_i32_0 : i32
    scf.if %2 {
      %cst_25 = arith.constant 0.000000e+00 : f32
      %c0_26 = arith.constant 0 : index
      %c0_27 = arith.constant 0 : index
      %57 = memref.load %arg6[%c0_26, %c0_27] : memref<1x2xf32, #tpu.memory_space<smem>>
      memref.store %cst_25, %arg6[%c0_26, %c0_27] : memref<1x2xf32, #tpu.memory_space<smem>>
      %cst_28 = arith.constant 0.000000e+00 : f32
      %c0_29 = arith.constant 0 : index
      %c1_30 = arith.constant 1 : index
      %58 = memref.load %arg6[%c0_29, %c1_30] : memref<1x2xf32, #tpu.memory_space<smem>>
      memref.store %cst_28, %arg6[%c0_29, %c1_30] : memref<1x2xf32, #tpu.memory_space<smem>>
    } else {
    }
    %c1_i32 = arith.constant 1 : i32
    %3 = arith.muli %arg0, %c1_i32 : i32
    %4 = arith.addi %3, %arg1 : i32
    %c8_i32 = arith.constant 8 : i32
    %5 = arith.muli %4, %c8_i32 : i32
    %c0 = arith.constant 0 : index
    %c0_1 = arith.constant 0 : index
    %6 = vector.load %arg2[%c0, %c0_1] : memref<8x10xf32, #tpu.memory_space<vmem>>, vector<8x10xf32>
    %c0_2 = arith.constant 0 : index
    %c0_3 = arith.constant 0 : index
    %7 = vector.load %arg3[%c0_2, %c0_3] : memref<8x32xf32, #tpu.memory_space<vmem>>, vector<8x32xf32>
    %c0_4 = arith.constant 0 : index
    %c0_5 = arith.constant 0 : index
    %8 = vector.load %arg5[%c0_4, %c0_5] : memref<10x32xf32, #tpu.memory_space<vmem>>, vector<10x32xf32>
    %c0_6 = arith.constant 0 : index
    %c0_7 = arith.constant 0 : index
    %9 = vector.load %arg4[%c0_6, %c0_7] : memref<8x1xi32, #tpu.memory_space<vmem>>, vector<8x1xi32>
    %10 = tpu.iota {dimensions = array<i32: 0>} : vector<8x1xi32>
    %11 = vector.broadcast %5 : i32 to vector<8x1xi32>
    %12 = arith.addi %11, %10 : vector<8x1xi32>
    %c8_i32_8 = arith.constant 8 : i32
    %13 = vector.broadcast %c8_i32_8 : i32 to vector<8x1xi32>
    %14 = arith.cmpi slt, %12, %13 : vector<8x1xi32>
    %15 = tpu.iota {dimensions = array<i32: 1>} : vector<8x10xi32>
    %16 = vector.broadcast %9 : vector<8x1xi32> to vector<8x10xi32>
    %17 = arith.cmpi eq, %16, %15 : vector<8x10xi32>
    %cst = arith.constant dense<0xFF800000> : vector<8xf32>
    %18 = vector.multi_reduction <maximumf>, %6, %cst [1] : vector<8x10xf32> to vector<8xf32>
    %19 = vector.shape_cast %18 : vector<8xf32> to vector<8x1xf32>
    %20 = vector.broadcast %19 : vector<8x1xf32> to vector<8x10xf32>
    %21 = arith.subf %6, %20 : vector<8x10xf32>
    %22 = math.exp %21 : vector<8x10xf32>
    %cst_9 = arith.constant dense<0.000000e+00> : vector<8xf32>
    %23 = vector.multi_reduction <add>, %22, %cst_9 [1] : vector<8x10xf32> to vector<8xf32>
    %24 = vector.shape_cast %23 : vector<8xf32> to vector<8x1xf32>
    %25 = math.log %24 : vector<8x1xf32>
    %26 = arith.addf %25, %19 : vector<8x1xf32>
    %cst_10 = arith.constant 0.000000e+00 : f32
    %27 = vector.broadcast %cst_10 : f32 to vector<8x10xf32>
    %28 = arith.select %17, %6, %27 : vector<8x10xi1>, vector<8x10xf32>
    %cst_11 = arith.constant dense<0.000000e+00> : vector<8xf32>
    %29 = vector.multi_reduction <add>, %28, %cst_11 [1] : vector<8x10xf32> to vector<8xf32>
    %30 = vector.shape_cast %29 : vector<8xf32> to vector<8x1xf32>
    %31 = arith.subf %26, %30 : vector<8x1xf32>
    %cst_12 = arith.constant 0.000000e+00 : f32
    %32 = vector.broadcast %cst_12 : f32 to vector<8x1xf32>
    %33 = arith.select %14, %31, %32 : vector<8x1xi1>, vector<8x1xf32>
    %34 = arith.extui %17 : vector<8x10xi1> to vector<8x10xi32>
    %35 = arith.sitofp %34 : vector<8x10xi32> to vector<8x10xf32>
    %cst_13 = arith.constant dense<0.000000e+00> : vector<8x32xf32>
    %36 = tpu.matmul %35, %8, %cst_13 {dimension_numbers = #tpu.dot_dimension_numbers<[1], [0], [0], [1], [0, 0, 1, 1], [], []>} : vector<8x10xf32>, vector<10x32xf32>, vector<8x32xf32> -> vector<8x32xf32>
    %37 = arith.subf %7, %36 : vector<8x32xf32>
    %38 = arith.mulf %37, %37 : vector<8x32xf32>
    %cst_14 = arith.constant dense<0.000000e+00> : vector<8xf32>
    %39 = vector.multi_reduction <add>, %38, %cst_14 [1] : vector<8x32xf32> to vector<8xf32>
    %40 = vector.shape_cast %39 : vector<8xf32> to vector<8x1xf32>
    %cst_15 = arith.constant 0.000000e+00 : f32
    %41 = vector.broadcast %cst_15 : f32 to vector<8x1xf32>
    %42 = arith.select %14, %40, %41 : vector<8x1xi1>, vector<8x1xf32>
    %c0_16 = arith.constant 0 : index
    %c0_17 = arith.constant 0 : index
    %43 = memref.load %arg6[%c0_16, %c0_17] : memref<1x2xf32, #tpu.memory_space<smem>>
    %44 = vector.shape_cast %33 : vector<8x1xf32> to vector<1x8x1xf32>
    %cst_18 = arith.constant dense<0.000000e+00> : vector<1xf32>
    %45 = vector.multi_reduction <add>, %44, %cst_18 [1, 2] : vector<1x8x1xf32> to vector<1xf32>
    %46 = vector.shape_cast %45 : vector<1xf32> to vector<1x1x1xf32>
    %47 = vector.extract %46[0, 0, 0] : f32 from vector<1x1x1xf32>
    %48 = arith.addf %43, %47 : f32
    %c0_19 = arith.constant 0 : index
    %c0_20 = arith.constant 0 : index
    %49 = memref.load %arg6[%c0_19, %c0_20] : memref<1x2xf32, #tpu.memory_space<smem>>
    memref.store %48, %arg6[%c0_19, %c0_20] : memref<1x2xf32, #tpu.memory_space<smem>>
    %c0_21 = arith.constant 0 : index
    %c1 = arith.constant 1 : index
    %50 = memref.load %arg6[%c0_21, %c1] : memref<1x2xf32, #tpu.memory_space<smem>>
    %51 = vector.shape_cast %42 : vector<8x1xf32> to vector<1x8x1xf32>
    %cst_22 = arith.constant dense<0.000000e+00> : vector<1xf32>
    %52 = vector.multi_reduction <add>, %51, %cst_22 [1, 2] : vector<1x8x1xf32> to vector<1xf32>
    %53 = vector.shape_cast %52 : vector<1xf32> to vector<1x1x1xf32>
    %54 = vector.extract %53[0, 0, 0] : f32 from vector<1x1x1xf32>
    %55 = arith.addf %50, %54 : f32
    %c0_23 = arith.constant 0 : index
    %c1_24 = arith.constant 1 : index
    %56 = memref.load %arg6[%c0_23, %c1_24] : memref<1x2xf32, #tpu.memory_space<smem>>
    memref.store %55, %arg6[%c0_23, %c1_24] : memref<1x2xf32, #tpu.memory_space<smem>>
    return
  }
  func.func @transform_0(%arg0: i32, %arg1: i32) -> (i32, i32) {
    %c1_i32 = arith.constant 1 : i32
    %0 = arith.muli %arg0, %c1_i32 : i32
    %1 = arith.addi %0, %arg1 : i32
    %c0_i32 = arith.constant 0 : i32
    %2 = arith.minsi %1, %c0_i32 : i32
    %c0_i32_0 = arith.constant 0 : i32
    %c0_i32_1 = arith.constant 0 : i32
    return %2, %c0_i32_0 : i32, i32
  }
  func.func @transform_1(%arg0: i32, %arg1: i32) -> (i32, i32) {
    %c1_i32 = arith.constant 1 : i32
    %0 = arith.muli %arg0, %c1_i32 : i32
    %1 = arith.addi %0, %arg1 : i32
    %c0_i32 = arith.constant 0 : i32
    %2 = arith.minsi %1, %c0_i32 : i32
    %c0_i32_0 = arith.constant 0 : i32
    %c0_i32_1 = arith.constant 0 : i32
    return %2, %c0_i32_0 : i32, i32
  }
  func.func @transform_2(%arg0: i32, %arg1: i32) -> (i32, i32) {
    %c1_i32 = arith.constant 1 : i32
    %0 = arith.muli %arg0, %c1_i32 : i32
    %1 = arith.addi %0, %arg1 : i32
    %c0_i32 = arith.constant 0 : i32
    %2 = arith.minsi %1, %c0_i32 : i32
    %c0_i32_0 = arith.constant 0 : i32
    %c0_i32_1 = arith.constant 0 : i32
    return %2, %c0_i32_0 : i32, i32
  }
  func.func @transform_3(%arg0: i32, %arg1: i32) -> (i32, i32) {
    %c0_i32 = arith.constant 0 : i32
    %c0_i32_0 = arith.constant 0 : i32
    %c0_i32_1 = arith.constant 0 : i32
    return %c0_i32, %c0_i32_0 : i32, i32
  }
  func.func @transform_4(%arg0: i32, %arg1: i32) -> (i32, i32) {
    %c0_i32 = arith.constant 0 : i32
    %c0_i32_0 = arith.constant 0 : i32
    return %arg0, %c0_i32 : i32, i32
  }
}

</mosaic_0001>

<llo_original>
// kernel: tpu_custom_call.1
$region0: #{tpu_custom_call.1}
  #allocation0 [shape = 'u32[]', space=smem, size = 0x4, offset = 0x4, fixed_abs, tag = 'smem constant byte address 0x4 - core index']
  #allocation1 [shape = 'u32[144,128]{1,0:T(1,128)}', space=vmem, size = 0x12000, scoped, tag = 'internal scratch']
  %s0 = inlined_call_operand.hbm [shape: f32[8,10], index: 0, kind: input, shape index: {}]
  %s1 = inlined_call_operand.hbm [shape: f32[8,32], index: 1, kind: input, shape index: {}]
  %s2 = inlined_call_operand.vmem [shape: s32[8,1], index: 2, kind: input, shape index: {}]
  %s3 = inlined_call_operand.vmem [shape: f32[10,32], index: 3, kind: input, shape index: {}]
  %s4 = inlined_call_operand.hbm [shape: f32[1,2], index: 4, kind: output, shape index: {}]
  %s5 = sld [smem:[#allocation0]]
  $region38: #{tpu_custom_call.1} parent=0
    _
  %s7 = ssub.s32 1, %s5
  %s8 = scalar_select 0, %s7, %s5
  $region1: #{tpu_custom_call.1} parent=0
    #allocation2 [shape = 'u8[4096]{0}', space=vmem, size = 0x1000, scoped, tag = 'input window, operand 0, single buffered']
    #allocation3 [shape = 's32[1]{0}', space=sflag, size = 0x4, scoped, tag = 'scoped memory for tpu_custom_call.1']
    #allocation4 [shape = 's32[1]{0}', space=sflag, size = 0x4, scoped, tag = 'scoped memory for tpu_custom_call.1']
    #allocation5 [shape = 'u8[4096]{0}', space=vmem, size = 0x1000, scoped, tag = 'input window, operand 1, single buffered']
    #allocation6 [shape = 's32[1]{0}', space=sflag, size = 0x4, scoped, tag = 'scoped memory for tpu_custom_call.1']
    #allocation7 [shape = 'u8[512]{0}', space=smem, size = 0x200, scoped, tag = 'output window, operand 0, single buffered']
    %9 = vsyncpa [#allocation3], 0
    %10 = vsyncpa [#allocation6], 0
    %11 = vsyncpa [#allocation4], 0
    // Predicated region
    $region2: #{tpu_custom_call.1} parent=1 // pred_check
      _
    $region3: #{tpu_custom_call.1} parent=1 // pred_check_branch
      %13 = sbr.rel (0) target = $region5
    $region4: #{tpu_custom_call.1} parent=1 // pred_region
      %s14 = sadd.s32 0, 0
      %p15 = scmp.lt.s32.totalorder %s14, 0
      %s16 = scalar_select %p15, %s14, 0
      %s18 = ssub.s32 128, 128
      %19 = vsyncadd [#allocation3], %s18
      %s20 = smul.addr %s16, 128
      %s21 = scalar_lea.hbm %s0, %s20
      %s23 = sshll.u32 [#allocation2], 4
      %s24 = int_to_ptr.vmem [resolvable:$true] %s23
      %26 = dma.hbm_to_vmem [thread:$0]  %s21, 128, %s24, [#allocation3]
    $region5: #{tpu_custom_call.1} parent=1 // pred_fallthru
      _
    // Predicated region
    $region6: #{tpu_custom_call.1} parent=1 // pred_check
      _
    $region7: #{tpu_custom_call.1} parent=1 // pred_check_branch
      %28 = sbr.rel (0) target = $region9
    $region8: #{tpu_custom_call.1} parent=1 // pred_region
      %s29 = sadd.s32 0, 0
      %p30 = scmp.lt.s32.totalorder %s29, 0
      %s31 = scalar_select %p30, %s29, 0
      %s33 = ssub.s32 128, 128
      %34 = vsyncadd [#allocation6], %s33
      %s35 = smul.addr %s31, 128
      %s36 = scalar_lea.hbm %s1, %s35
      %s38 = sshll.u32 [#allocation5], 4
      %s39 = int_to_ptr.vmem [resolvable:$true] %s38
      %41 = dma.hbm_to_vmem [thread:$0]  %s36, 128, %s39, [#allocation6]
    $region9: #{tpu_custom_call.1} parent=1 // pred_fallthru
      _
    // Predicated region
    $region10: #{tpu_custom_call.1} parent=1 // pred_check
      _
    $region11: #{tpu_custom_call.1} parent=1 // pred_check_branch
      %43 = sbr.rel (0) target = $region13
    $region12: #{tpu_custom_call.1} parent=1 // pred_region
      %s44 = sadd.s32 0, 0
      %p45 = scmp.lt.s32.totalorder %s44, 0
      %s46 = scalar_select %p45, %s44, 0
      %p47 = scmp.lt.s32.totalorder %s46, 0
      %s48 = scalar_select %p47, %s46, 0
      %s49 = smul.addr %s48, 8
      %s50 = scalar_lea.vmem %s2, %s49
      %s51 = sadd.s32 0, 0
      %p52 = scmp.lt.s32.totalorder %s51, 0
      %s53 = scalar_select %p52, %s51, 0
    $region13: #{tpu_custom_call.1} parent=1 // pred_fallthru
      _
    // Predicated region
    $region14: #{tpu_custom_call.1} parent=1 // pred_check
      _
    $region15: #{tpu_custom_call.1} parent=1 // pred_check_branch
      %55 = sbr.rel (0) target = $region17
    $region16: #{tpu_custom_call.1} parent=1 // pred_region
      _
    $region17: #{tpu_custom_call.1} parent=1 // pred_fallthru
      _
    // Predicated region
    $region18: #{tpu_custom_call.1} parent=1 // pred_check
      _
    $region19: #{tpu_custom_call.1} parent=1 // pred_check_branch
      %57 = sbr.rel (0) target = $region21
    $region20: #{tpu_custom_call.1} parent=1 // pred_region
      %58 = dma.done [#allocation3], 128
    $region21: #{tpu_custom_call.1} parent=1 // pred_fallthru
      _
    // Predicated region
    $region22: #{tpu_custom_call.1} parent=1 // pred_check
      _
    $region23: #{tpu_custom_call.1} parent=1 // pred_check_branch
      %60 = sbr.rel (0) target = $region25
    $region24: #{tpu_custom_call.1} parent=1 // pred_region
      %61 = dma.done [#allocation6], 128
    $region25: #{tpu_custom_call.1} parent=1 // pred_fallthru
      _
    %s62 = sadd.s32 0, 0
    %p63 = scmp.lt.s32.totalorder %s62, 0
    %s64 = scalar_select %p63, %s62, 0
    %p65 = scmp.lt.s32.totalorder %s64, 0
    %s66 = scalar_select %p65, %s64, 0
    %s67 = smul.addr %s66, 8
    %s68 = scalar_lea.vmem %s2, %s67
    %s69 = sadd.s32 0, 0
    %p70 = scmp.lt.s32.totalorder %s69, 0
    %s71 = scalar_select %p70, %s69, 0
    %s72 = sadd.s32 0, 0
    %p73 = scmp.lt.s32.totalorder %s72, 0
    %s74 = scalar_select %p73, %s72, 0
    %s75 = sadd.s32 0, 0
    %p76 = scmp.lt.s32.totalorder %s75, 0
    %s77 = scalar_select %p76, %s75, 0
    %p78 = scmp.lt.s32.totalorder %s77, 0
    %s79 = scalar_select %p78, %s77, 0
    %s80 = smul.addr %s79, 8
    %s81 = scalar_lea.vmem %s2, %s80
    %s82 = sadd.s32 0, 0
    %p83 = scmp.lt.s32.totalorder %s82, 0
    %s84 = scalar_select %p83, %s82, 0
    %p85 = scmp.eq.s32.totalorder 0, 0
    // Predicated region
    $region26: #{tpu_custom_call.1} parent=1 // pred_check
      %p86 = pneg %p85
    $region27: #{tpu_custom_call.1} parent=1 // pred_check_branch
      %88 = sbr.rel (%p86) target = $region29
    $region28: #{tpu_custom_call.1} parent=1 // pred_region
      %s89 = scalar_lea.smem [#allocation7], 0
      %90 = sst [smem:[%s89]] 0.0
      %s91 = scalar_lea.smem [#allocation7], 1
      %92 = sst [smem:[%s91]] 0.0
    $region29: #{tpu_custom_call.1} parent=1 // pred_fallthru
      _
    %s93 = sadd.s32 0, 0
    %s94 = smul.u32 %s93, 8
    %v95 = vld [vmem:[#allocation2] sm:$0xff]
    %v96 = vld [vmem:[#allocation5] sm:$0xff]
    %v97 = vld [vmem:[%s3] sm:$0xff]
    %v98 = vld [vmem:[%s3 + $0x8] sm:$0x3]
    %v99 = vld [vmem:[%s81] sm:$0xff]
    %v100 = vlaneseq
    %v101 = vshrl.u32 %v100, 7
    %v102 = vstv %s94
    %v103 = vadd.s32 %v102, %v101
    %vm104 = vcmp.lt.s32.totalorder %v103, 8
    %v105 = vlaneseq
    %v106 = vand.u32 %v105, 127
    %107 = vset.pattern.permute.xlu0 0
    %108 = vperm.xlu0 %107, %v99
    %v109 = vpop.permute.xlu0 %108
    %vm110 = vcmp.eq.s32.totalorder %v109, %v106
    %vm111 = vcmask 80896
    %v112 = vsel %vm111, %v95, -inf
    %113 = vmax.xlane.f32.xlu0 %v112
    %v114 = vpop.xlane.xlu0 %113
    %v115 = vsub.f32 %v95, %v114
    %v116 = vmul.f32 %v115, 1.442695
    %v117 = vpow.pop %v116
    %v118 = vsel %vm111, %v117, 0.0
    %119 = vadd.xlane.f32.xlu0 %v118
    %v120 = vpop.xlane.xlu0 %119
    %v121 = vlog2.pop %v120
    %v122 = vmul.f32 %v121, 0.6931472
    %v123 = vadd.f32 %v122, %v114
    %v124 = vsel %vm110, %v95, 0.0
    %v125 = vsel %vm111, %v124, 0.0
    %126 = vadd.xlane.f32.xlu0 %v125
    %v127 = vpop.xlane.xlu0 %126
    %v128 = vsub.f32 %v123, %v127
    %v129 = vsel %vm104, %v128, 0.0
    %v130 = vsel %vm110, 1, 0
    %v131 = vcvt.s32.f32 %v130
    %v133 = vsel %vm111, %v131, 0
    %vm135 = vcmask 1041408
    %v137 = vsel %vm135, %v98, 0
    %139 = vmatprep.subr.mxu0 0.0
    %140 = vmatpush1.msra.mxu0 %v97
    %141 = vmatprep.subr.mxu0 0.0
    %142 = vmatpush1.msra.mxu0 %v137
    %143 = vmatprep.subr.mxu0 0.0
    %144 = vmatpush1.msra.mxu0 0.0
    %145 = vmatprep.subr.mxu0 0.0
    %146 = vmatpush1.msra.mxu0 0.0
    %147 = vmatprep.subr.mxu0 0.0
    %148 = vmatpush1.msra.mxu0 0.0
    %149 = vmatprep.subr.mxu0 0.0
    %150 = vmatpush1.msra.mxu0 0.0
    %151 = vmatprep.subr.mxu0 0.0
    %152 = vmatpush1.msra.mxu0 0.0
    %153 = vmatprep.subr.mxu0 0.0
    %154 = vmatpush1.msra.mxu0 0.0
    %155 = vmatprep.subr.mxu0 0.0
    %156 = vmatpush1.msra.mxu0 0.0
    %157 = vmatprep.subr.mxu0 0.0
    %158 = vmatpush1.msra.mxu0 0.0
    %159 = vmatprep.subr.mxu0 0.0
    %160 = vmatpush1.msra.mxu0 0.0
    %161 = vmatprep.subr.mxu0 0.0
    %162 = vmatpush1.msra.mxu0 0.0
    %163 = vmatprep.subr.mxu0 0.0
    %164 = vmatpush1.msra.mxu0 0.0
    %165 = vmatprep.subr.mxu0 0.0
    %166 = vmatpush1.msra.mxu0 0.0
    %167 = vmatprep.subr.mxu0 0.0
    %168 = vmatpush1.msra.mxu0 0.0
    %169 = vmatprep.subr.mxu0 0.0
    %170 = vmatpush1.msra.mxu0 0.0
    %171 = vmatprep.subr.mxu0 0.0
    %172 = vmatpush1.msra.mxu0 0.0
    %173 = vmatprep.subr.mxu0 0.0
    %174 = vmatpush1.msra.mxu0 0.0
    %175 = vmatprep.subr.mxu0 0.0
    %176 = vmatpush1.msra.mxu0 0.0
    %177 = vmatprep.subr.mxu0 0.0
    %178 = vmatpush1.msra.mxu0 0.0
    %179 = vmatprep.subr.mxu0 0.0
    %180 = vmatpush1.msra.mxu0 0.0
    %181 = vmatprep.subr.mxu0 0.0
    %182 = vmatpush1.msra.mxu0 0.0
    %183 = vmatprep.subr.mxu0 0.0
    %184 = vmatpush1.msra.mxu0 0.0
    %185 = vmatprep.subr.mxu0 0.0
    %186 = vmatpush1.msra.mxu0 0.0
    %187 = vmatprep.subr.mxu0 0.0
    %188 = vmatpush1.msra.mxu0 0.0
    %189 = vmatprep.subr.mxu0 0.0
    %190 = vmatpush1.msra.mxu0 0.0
    %191 = vmatprep.subr.mxu0 0.0
    %192 = vmatpush1.msra.mxu0 0.0
    %193 = vmatprep.subr.mxu0 0.0
    %194 = vmatpush1.msra.mxu0 0.0
    %195 = vmatprep.subr.mxu0 0.0
    %196 = vmatpush1.msra.mxu0 0.0
    %197 = vmatprep.subr.mxu0 0.0
    %198 = vmatpush1.msra.mxu0 0.0
    %199 = vmatprep.subr.mxu0 0.0
    %200 = vmatpush1.msra.mxu0 0.0
    %201 = vmatprep.subr.mxu0 0.0
    %202 = vmatpush1.msra.mxu0 0.0
    %203 = vmatprep.mubr.f32.mxu0 0.0
    %204 = vmatmul.mubr.f32.gmra.mrb[0].mxu0 %v133
    %v205 = vpop.f32.mrb[0].mxu0
    %v206 = vadd.f32 0.0, %v205
    %v207 = vpop.f32.mrb[0].mxu0
    %208 = vdwg.mxu0
    %v209 = vsub.f32 %v96, %v206
    %v210 = vmul.f32 %v209, %v209
    %vm211 = vcmask 261120
    %v212 = vsel %vm211, %v210, 0.0
    %213 = vadd.xlane.f32.xlu0 %v212
    %v214 = vpop.xlane.xlu0 %213
    %v215 = vsel %vm104, %v214, 0.0
    %s216 = sld [smem:[#allocation7]]
    %vm217 = vcmask 7168
    %v218 = vsel %vm217, %v129, 0.0
    %219 = vadd.xlane.f32.xlu0 %v218
    %v220 = vpop.xlane.xlu0 %219
    %v221 = vrot.slane %v220, 4
    %v222 = vadd.f32 %v220, %v221
    %v223 = vrot.slane %v222, 2
    %v224 = vadd.f32 %v222, %v223
    %v225 = vrot.slane %v224, 1
    %v226 = vadd.f32 %v224, %v225
    %s227 = vtos %v226
    %s228 = sadd.f32 %s216, %s227
    %s229 = scalar_lea.smem [#allocation7], 0
    %230 = sst [smem:[%s229]] %s228
    %s231 = sld [smem:[#allocation7 + $0x1]]
    %v232 = vsel %vm217, %v215, 0.0
    %233 = vadd.xlane.f32.xlu0 %v232
    %v234 = vpop.xlane.xlu0 %233
    %v235 = vrot.slane %v234, 4
    %v236 = vadd.f32 %v234, %v235
    %v237 = vrot.slane %v236, 2
    %v238 = vadd.f32 %v236, %v237
    %v239 = vrot.slane %v238, 1
    %v240 = vadd.f32 %v238, %v239
    %s241 = vtos %v240
    %s242 = sadd.f32 %s231, %s241
    %s243 = scalar_lea.smem [#allocation7], 1
    %244 = sst [smem:[%s243]] %s242
    // Predicated region
    $region30: #{tpu_custom_call.1} parent=1 // pred_check
      _
    $region31: #{tpu_custom_call.1} parent=1 // pred_check_branch
      %246 = sbr.rel (0) target = $region33
    $region32: #{tpu_custom_call.1} parent=1 // pred_region
      %s248 = ssub.s32 16, 16
      %249 = vsyncadd [#allocation4], %s248
      %252 = dma.smem_to_hbm [#allocation7], 16, %s4, [#allocation4]
    $region33: #{tpu_custom_call.1} parent=1 // pred_fallthru
      _
    // Predicated region
    $region34: #{tpu_custom_call.1} parent=1 // pred_check
      _
    $region35: #{tpu_custom_call.1} parent=1 // pred_check_branch
      %254 = sbr.rel (0) target = $region37
    $region36: #{tpu_custom_call.1} parent=1 // pred_region
      %255 = dma.done [#allocation4], 16
    $region37: #{tpu_custom_call.1} parent=1 // pred_fallthru
      _
    %256 = sfence
    %257 = vsyncpa [#allocation3], 1
    %258 = vsyncpa [#allocation6], 1
    %259 = vsyncpa [#allocation4], 1

</llo_original>
